<compile_context>
chip_gen: v7x
topology: tpu7x:2x2x1
jax: 0.10.0
libtpu: 0.0.40
codegen_flags: <defaults>
</compile_context>

<pallas_src>
import functools

import jax
import jax.numpy as jnp
from jax import lax
from jax.experimental import pallas as pl
from jax.experimental.pallas import tpu as pltpu


def dkd_kernel(s_ref, t_ref, lab_ref, out_ref, *, alpha, beta, inv_t,
               n_rows, row_tile):
    """Per-row (unscaled) DKD loss for one batch tile.

    Class lanes are pre-padded with a huge negative value in the wrapper, so
    padded lanes exp-underflow to exactly 0 and never need masking here.
    """
    i = pl.program_id(0)

    s = s_ref[...].astype(jnp.float32) * inv_t      # (TB, Cp) tempered student
    t = t_ref[...].astype(jnp.float32) * inv_t      # (TB, Cp) tempered teacher
    labels = lab_ref[...]                           # (TB, 1) int32
    tb, cp = s.shape

    col = lax.broadcasted_iota(jnp.int32, (tb, cp), 1)
    gt = col == labels                              # one-hot target mask

    # Stable shifted logits + ONE exp pass per tensor.
    s_shift = s - jnp.max(s, axis=1, keepdims=True)
    t_shift = t - jnp.max(t, axis=1, keepdims=True)
    e_s = jnp.exp(s_shift)                          # padded lanes -> exactly 0
    e_t = jnp.exp(t_shift)

    # Target column mass (exact), non-target mass by subtraction.
    e_s_gt_col = jnp.where(gt, e_s, 0.0)
    e_t_gt_col = jnp.where(gt, e_t, 0.0)
    e_s_gt = jnp.sum(e_s_gt_col, axis=1, keepdims=True)      # (TB, 1)
    e_t_gt = jnp.sum(e_t_gt_col, axis=1, keepdims=True)
    total_s = jnp.sum(e_s, axis=1, keepdims=True)
    total_t = jnp.sum(e_t, axis=1, keepdims=True)
    denom_s = total_s - e_s_gt                                # non-target mass
    denom_t = total_t - e_t_gt

    # ---- TCKD: KL over the binary (target vs non-target) distribution ----
    # All per-row (TB,1) work: negligible.
    s1 = e_s_gt / total_s
    s2 = denom_s / total_s
    t1 = e_t_gt / total_t
    t2 = denom_t / total_t
    tckd = (jnp.where(t1 > 0.0, t1 * (jnp.log(t1) - jnp.log(s1)), 0.0)
            + jnp.where(t2 > 0.0, t2 * (jnp.log(t2) - jnp.log(s2)), 0.0))

    # ---- NCKD: KL over non-target classes, algebraically fused ----
    # sum_other p_t2 == 1, so
    #   nckd = sum_other(e_t * (t_shift - s_shift)) / denom_t
    #          - (log denom_t - log denom_s)
    # e_t_nt is exactly 0 on the target column and on padded lanes, so the
    # per-element product needs no further masking and stays finite.
    ts_diff = t_shift - s_shift
    e_t_nt = e_t - e_t_gt_col
    num = jnp.sum(e_t_nt * ts_diff, axis=1, keepdims=True)
    nckd = num / denom_t - (jnp.log(denom_t) - jnp.log(denom_s))

    # Mask batch-padding rows; per-row unscaled loss.
    row = lax.broadcasted_iota(jnp.int32, (tb, 1), 0) + i * row_tile
    row_valid = (row < n_rows).astype(jnp.float32)
    out_ref[...] = row_valid * (alpha * tckd + beta * nckd)


def _round_up(x, m):
    return (x + m - 1) // m * m


def _vmem_limit_bytes():
    """Scoped-VMEM request derived from the actual chip (fallback: v7x 64MiB)."""
    cap = 64 * 1024 * 1024
    try:
        info = pltpu.get_tpu_info()
        cap = int(info.vmem_capacity_bytes)
    except Exception:
        pass
    # Leave headroom for Mosaic's own scratch; cap the request at 96 MiB.
    return min(int(cap * 3 // 4), 96 * 1024 * 1024)


def _choose_row_tile(batch, cp, in_bytes, vmem_limit):
    # Conservative live set: ~14 full-size (TB, Cp) f32-equivalent intermediates
    # (s, t, shifts, exps, masked cols, e_t_nt, ts_diff, product, iota, mask)
    # plus 2 inputs x 2 double-buffered pipeline tiles.
    budget = vmem_limit // 2
    per_row = cp * (14 * 4 + 4 * in_bytes)
    tb = (budget // per_row) // 8 * 8
    tb = max(8, min(1024, int(tb)))
    full = _round_up(batch, 8)
    tb = min(tb, full)
    # v7x megacore: make sure there are >= 2 independent tiles so both
    # TensorCores get work (tiles are fully independent -> "parallel" axis).
    if tb >= full and batch > 8:
        tb = max(8, _round_up(full // 2, 8))
    return tb


def dkd_loss(s_logits, t_logits, labels, *, alpha=1.0, beta=1.0, T=4.0):
    """Pallas DKD loss. s_logits/t_logits: (B, C) float; labels: (B,) int."""
    b, c = s_logits.shape
    in_bytes = jnp.dtype(s_logits.dtype).itemsize
    vmem_limit = _vmem_limit_bytes()

    cp = _round_up(c, 128)                        # lane-dense class dim
    tb = _choose_row_tile(b, cp, in_bytes, vmem_limit)
    bp = _round_up(b, tb)
    num_tiles = bp // tb

    # Pad with a huge NEGATIVE value so padded class lanes exp-underflow to 0
    # inside the kernel (no per-element column mask needed). Keep it finite so
    # t_shift - s_shift stays finite on padded lanes (0 * finite == 0).
    finfo = jnp.finfo(s_logits.dtype)
    neg_pad = max(-1.0e30, float(finfo.min) / 2)

    labels_i32 = labels.reshape(-1).astype(jnp.int32)
    if bp != b or cp != c:
        s_logits = jnp.pad(s_logits, ((0, bp - b), (0, cp - c)),
                           constant_values=neg_pad)
        t_logits = jnp.pad(t_logits, ((0, bp - b), (0, cp - c)),
                           constant_values=neg_pad)
        labels_i32 = jnp.pad(labels_i32, (0, bp - b))
    labels_2d = labels_i32.reshape(bp, 1)

    kernel = functools.partial(
        dkd_kernel, alpha=float(alpha), beta=float(beta),
        inv_t=float(1.0 / T), n_rows=b, row_tile=tb)

    per_row = pl.pallas_call(
        kernel,
        out_shape=jax.ShapeDtypeStruct((bp, 1), jnp.float32),
        grid=(num_tiles,),
        in_specs=[
            pl.BlockSpec((tb, cp), lambda i: (i, 0)),   # student logits tile
            pl.BlockSpec((tb, cp), lambda i: (i, 0)),   # teacher logits tile
            pl.BlockSpec((tb, 1), lambda i: (i, 0)),    # labels tile
        ],
        out_specs=pl.BlockSpec((tb, 1), lambda i: (i, 0)),
        compiler_params=pltpu.CompilerParams(
            dimension_semantics=("parallel",),
            vmem_limit_bytes=vmem_limit),
        cost_estimate=pl.CostEstimate(
            flops=15 * bp * cp,
            transcendentals=2 * bp * cp + 8 * bp,
            bytes_accessed=2 * bp * cp * in_bytes + bp * 4 + bp * 4,
        ),
    )(s_logits, t_logits, labels_2d)

    # Final reduce + scale with the GLOBAL batch size (matches PyTorch ref).
    return jnp.sum(per_row) * jnp.float32(T * T / b)


def _dkd_reference(s_logits, t_logits, labels, alpha, beta, T):
    """Pure-JAX port of the PyTorch DKDLoss forward (for verification)."""
    b, c = s_logits.shape
    gt = jax.nn.one_hot(labels, c, dtype=jnp.float32)
    other = 1.0 - gt

    def kl_sum(target, log_pred):
        return jnp.sum(jnp.where(target > 0.0,
                                 target * (jnp.log(target) - log_pred), 0.0))

    s_pred = jax.nn.softmax(s_logits / T, axis=1)
    t_pred = jax.nn.softmax(t_logits / T, axis=1)
    s_cat = jnp.concatenate([(s_pred * gt).sum(1, keepdims=True),
                             (s_pred * other).sum(1, keepdims=True)], axis=1)
    t_cat = jnp.concatenate([(t_pred * gt).sum(1, keepdims=True),
                             (t_pred * other).sum(1, keepdims=True)], axis=1)
    tckd = kl_sum(t_cat, jnp.log(s_cat)) * T * T / b
    t_part2 = jax.nn.softmax(t_logits / T - 1000.0 * gt, axis=1)
    log_s_part2 = jax.nn.log_softmax(s_logits / T - 1000.0 * gt, axis=1)
    nckd = kl_sum(t_part2, log_s_part2) * T * T / b
    return alpha * tckd + beta * nckd


if __name__ == "__main__":
    B, C = 8, 32  # batch, num classes
    key = jax.random.PRNGKey(0)
    k1, k2, k3 = jax.random.split(key, 3)
    s_logits = jax.random.normal(k1, (B, C), dtype=jnp.float32) * 2.0
    t_logits = jax.random.normal(k2, (B, C), dtype=jnp.float32) * 2.0
    labels = jax.random.randint(k3, (B,), 0, C, dtype=jnp.int32)

    loss = dkd_loss(s_logits, t_logits, labels, alpha=1.0, beta=1.0, T=4.0)
    jax.block_until_ready(loss)

    ref = _dkd_reference(s_logits, t_logits, labels, 1.0, 1.0, 4.0)
    assert jnp.allclose(loss, ref, rtol=2e-3, atol=1e-5), (loss, ref)
    print("KERNEL_OK")
</pallas_src>

<mosaic_0001>
module attributes {stable_mosaic.version = 11 : i64} {
  func.func @dkd_kernel(%arg0: i32, %arg1: memref<8x128xf32, #tpu.memory_space<vmem>>, %arg2: memref<8x128xf32, #tpu.memory_space<vmem>>, %arg3: memref<8x1xi32, #tpu.memory_space<vmem>>, %arg4: memref<8x1xf32, #tpu.memory_space<vmem>>) attributes {dimension_semantics = [#tpu.dimension_semantics<parallel>], iteration_bounds = array<i64: 1>, scalar_prefetch = 0 : i64, scratch_operands = 0 : i64, tpu.core_type = #tpu.core_type<tc>, window_params = [{transform_indices = @transform_0, window_bounds = array<i64: 8, 128>}, {transform_indices = @transform_1, window_bounds = array<i64: 8, 128>}, {transform_indices = @transform_2, window_bounds = array<i64: 8, 1>}, {transform_indices = @transform_3, window_bounds = array<i64: 8, 1>}]} {
    %c0 = arith.constant 0 : index
    %c0_0 = arith.constant 0 : index
    %0 = vector.load %arg1[%c0, %c0_0] : memref<8x128xf32, #tpu.memory_space<vmem>>, vector<8x128xf32>
    %cst = arith.constant 2.500000e-01 : f32
    %1 = vector.broadcast %cst : f32 to vector<8x128xf32>
    %2 = arith.mulf %0, %1 : vector<8x128xf32>
    %c0_1 = arith.constant 0 : index
    %c0_2 = arith.constant 0 : index
    %3 = vector.load %arg2[%c0_1, %c0_2] : memref<8x128xf32, #tpu.memory_space<vmem>>, vector<8x128xf32>
    %cst_3 = arith.constant 2.500000e-01 : f32
    %4 = vector.broadcast %cst_3 : f32 to vector<8x128xf32>
    %5 = arith.mulf %3, %4 : vector<8x128xf32>
    %c0_4 = arith.constant 0 : index
    %c0_5 = arith.constant 0 : index
    %6 = vector.load %arg3[%c0_4, %c0_5] : memref<8x1xi32, #tpu.memory_space<vmem>>, vector<8x1xi32>
    %7 = tpu.iota {dimensions = array<i32: 1>} : vector<8x128xi32>
    %8 = vector.broadcast %6 : vector<8x1xi32> to vector<8x128xi32>
    %9 = arith.cmpi eq, %7, %8 : vector<8x128xi32>
    %cst_6 = arith.constant dense<0xFF800000> : vector<8xf32>
    %10 = vector.multi_reduction <maximumf>, %2, %cst_6 [1] : vector<8x128xf32> to vector<8xf32>
    %11 = vector.shape_cast %10 : vector<8xf32> to vector<8x1xf32>
    %12 = vector.broadcast %11 : vector<8x1xf32> to vector<8x128xf32>
    %13 = arith.subf %2, %12 : vector<8x128xf32>
    %cst_7 = arith.constant dense<0xFF800000> : vector<8xf32>
    %14 = vector.multi_reduction <maximumf>, %5, %cst_7 [1] : vector<8x128xf32> to vector<8xf32>
    %15 = vector.shape_cast %14 : vector<8xf32> to vector<8x1xf32>
    %16 = vector.broadcast %15 : vector<8x1xf32> to vector<8x128xf32>
    %17 = arith.subf %5, %16 : vector<8x128xf32>
    %18 = math.exp %13 : vector<8x128xf32>
    %19 = math.exp %17 : vector<8x128xf32>
    %cst_8 = arith.constant 0.000000e+00 : f32
    %20 = vector.broadcast %cst_8 : f32 to vector<8x128xf32>
    %21 = arith.select %9, %18, %20 : vector<8x128xi1>, vector<8x128xf32>
    %cst_9 = arith.constant 0.000000e+00 : f32
    %22 = vector.broadcast %cst_9 : f32 to vector<8x128xf32>
    %23 = arith.select %9, %19, %22 : vector<8x128xi1>, vector<8x128xf32>
    %cst_10 = arith.constant dense<0.000000e+00> : vector<8xf32>
    %24 = vector.multi_reduction <add>, %21, %cst_10 [1] : vector<8x128xf32> to vector<8xf32>
    %25 = vector.shape_cast %24 : vector<8xf32> to vector<8x1xf32>
    %cst_11 = arith.constant dense<0.000000e+00> : vector<8xf32>
    %26 = vector.multi_reduction <add>, %23, %cst_11 [1] : vector<8x128xf32> to vector<8xf32>
    %27 = vector.shape_cast %26 : vector<8xf32> to vector<8x1xf32>
    %cst_12 = arith.constant dense<0.000000e+00> : vector<8xf32>
    %28 = vector.multi_reduction <add>, %18, %cst_12 [1] : vector<8x128xf32> to vector<8xf32>
    %29 = vector.shape_cast %28 : vector<8xf32> to vector<8x1xf32>
    %cst_13 = arith.constant dense<0.000000e+00> : vector<8xf32>
    %30 = vector.multi_reduction <add>, %19, %cst_13 [1] : vector<8x128xf32> to vector<8xf32>
    %31 = vector.shape_cast %30 : vector<8xf32> to vector<8x1xf32>
    %32 = arith.subf %29, %25 : vector<8x1xf32>
    %33 = arith.subf %31, %27 : vector<8x1xf32>
    %34 = arith.divf %25, %29 : vector<8x1xf32>
    %35 = arith.divf %32, %29 : vector<8x1xf32>
    %36 = arith.divf %27, %31 : vector<8x1xf32>
    %37 = arith.divf %33, %31 : vector<8x1xf32>
    %cst_14 = arith.constant 0.000000e+00 : f32
    %38 = vector.broadcast %cst_14 : f32 to vector<8x1xf32>
    %39 = arith.cmpf ogt, %36, %38 : vector<8x1xf32>
    %40 = math.log %36 : vector<8x1xf32>
    %41 = math.log %34 : vector<8x1xf32>
    %42 = arith.subf %40, %41 : vector<8x1xf32>
    %43 = arith.mulf %36, %42 : vector<8x1xf32>
    %cst_15 = arith.constant 0.000000e+00 : f32
    %44 = vector.broadcast %cst_15 : f32 to vector<8x1xf32>
    %45 = arith.select %39, %43, %44 : vector<8x1xi1>, vector<8x1xf32>
    %cst_16 = arith.constant 0.000000e+00 : f32
    %46 = vector.broadcast %cst_16 : f32 to vector<8x1xf32>
    %47 = arith.cmpf ogt, %37, %46 : vector<8x1xf32>
    %48 = math.log %37 : vector<8x1xf32>
    %49 = math.log %35 : vector<8x1xf32>
    %50 = arith.subf %48, %49 : vector<8x1xf32>
    %51 = arith.mulf %37, %50 : vector<8x1xf32>
    %cst_17 = arith.constant 0.000000e+00 : f32
    %52 = vector.broadcast %cst_17 : f32 to vector<8x1xf32>
    %53 = arith.select %47, %51, %52 : vector<8x1xi1>, vector<8x1xf32>
    %54 = arith.addf %45, %53 : vector<8x1xf32>
    %55 = arith.subf %17, %13 : vector<8x128xf32>
    %56 = arith.subf %19, %23 : vector<8x128xf32>
    %57 = arith.mulf %56, %55 : vector<8x128xf32>
    %cst_18 = arith.constant dense<0.000000e+00> : vector<8xf32>
    %58 = vector.multi_reduction <add>, %57, %cst_18 [1] : vector<8x128xf32> to vector<8xf32>
    %59 = vector.shape_cast %58 : vector<8xf32> to vector<8x1xf32>
    %60 = arith.divf %59, %33 : vector<8x1xf32>
    %61 = math.log %33 : vector<8x1xf32>
    %62 = math.log %32 : vector<8x1xf32>
    %63 = arith.subf %61, %62 : vector<8x1xf32>
    %64 = arith.subf %60, %63 : vector<8x1xf32>
    %65 = tpu.iota {dimensions = array<i32: 0>} : vector<8x1xi32>
    %c8_i32 = arith.constant 8 : i32
    %66 = arith.muli %arg0, %c8_i32 : i32
    %67 = vector.broadcast %66 : i32 to vector<8x1xi32>
    %68 = arith.addi %65, %67 : vector<8x1xi32>
    %c8_i32_19 = arith.constant 8 : i32
    %69 = vector.broadcast %c8_i32_19 : i32 to vector<8x1xi32>
    %70 = arith.cmpi slt, %68, %69 : vector<8x1xi32>
    %71 = arith.extui %70 : vector<8x1xi1> to vector<8x1xi32>
    %72 = arith.sitofp %71 : vector<8x1xi32> to vector<8x1xf32>
    %cst_20 = arith.constant 1.000000e+00 : f32
    %73 = vector.broadcast %cst_20 : f32 to vector<8x1xf32>
    %74 = arith.mulf %73, %54 : vector<8x1xf32>
    %cst_21 = arith.constant 1.000000e+00 : f32
    %75 = vector.broadcast %cst_21 : f32 to vector<8x1xf32>
    %76 = arith.mulf %75, %64 : vector<8x1xf32>
    %77 = arith.addf %74, %76 : vector<8x1xf32>
    %78 = arith.mulf %72, %77 : vector<8x1xf32>
    %c0_22 = arith.constant 0 : index
    %c0_23 = arith.constant 0 : index
    %79 = vector.load %arg4[%c0_22, %c0_23] : memref<8x1xf32, #tpu.memory_space<vmem>>, vector<8x1xf32>
    tpu.vector_store %arg4[%c0_22, %c0_23], %78 {strides = array<i32>} : memref<8x1xf32, #tpu.memory_space<vmem>>, vector<8x1xf32>,
    return
  }
  func.func @transform_0(%arg0: i32) -> (i32, i32) {
    %c0_i32 = arith.constant 0 : i32
    %c0_i32_0 = arith.constant 0 : i32
    return %arg0, %c0_i32 : i32, i32
  }
  func.func @transform_1(%arg0: i32) -> (i32, i32) {
    %c0_i32 = arith.constant 0 : i32
    %c0_i32_0 = arith.constant 0 : i32
    return %arg0, %c0_i32 : i32, i32
  }
  func.func @transform_2(%arg0: i32) -> (i32, i32) {
    %c0_i32 = arith.constant 0 : i32
    %c0_i32_0 = arith.constant 0 : i32
    return %arg0, %c0_i32 : i32, i32
  }
  func.func @transform_3(%arg0: i32) -> (i32, i32) {
    %c0_i32 = arith.constant 0 : i32
    %c0_i32_0 = arith.constant 0 : i32
    return %arg0, %c0_i32 : i32, i32
  }
}

</mosaic_0001>

<llo_original>
// kernel: tpu_custom_call.1
$region0: #{tpu_custom_call.1}
  #allocation0 [shape = 'u32[]', space=smem, size = 0x4, offset = 0x4, fixed_abs, tag = 'smem constant byte address 0x4 - core index']
  #allocation1 [shape = 'u32[144,128]{1,0:T(1,128)}', space=vmem, size = 0x12000, scoped, tag = 'internal scratch']
  %s0 = inlined_call_operand.vmem [shape: f32[8,128], index: 0, kind: input, shape index: {}]
  %s1 = inlined_call_operand.hbm [shape: f32[8,128], index: 1, kind: input, shape index: {}]
  %s2 = inlined_call_operand.vmem [shape: s32[8,1], index: 2, kind: input, shape index: {}]
  %s3 = inlined_call_operand.vmem [shape: f32[8,1], index: 3, kind: output, shape index: {}]
  %s4 = sld [smem:[#allocation0]]
  $region26: #{tpu_custom_call.1} parent=0
    _
  %s6 = ssub.s32 1, %s4
  %s7 = scalar_select 0, %s6, %s4
  $region1: #{tpu_custom_call.1} parent=0
    #allocation2 [shape = 'u8[4096]{0}', space=vmem, size = 0x1000, scoped, tag = 'input window, operand 1, single buffered']
    #allocation3 [shape = 's32[1]{0}', space=sflag, size = 0x4, scoped, tag = 'scoped memory for tpu_custom_call.1']
    %8 = vsyncpa [#allocation3], 0
    // Predicated region
    $region2: #{tpu_custom_call.1} parent=1 // pred_check
      _
    $region3: #{tpu_custom_call.1} parent=1 // pred_check_branch
      %10 = sbr.rel (0) target = $region5
    $region4: #{tpu_custom_call.1} parent=1 // pred_region
      _
    $region5: #{tpu_custom_call.1} parent=1 // pred_fallthru
      _
    // Predicated region
    $region6: #{tpu_custom_call.1} parent=1 // pred_check
      _
    $region7: #{tpu_custom_call.1} parent=1 // pred_check_branch
      %12 = sbr.rel (0) target = $region9
    $region8: #{tpu_custom_call.1} parent=1 // pred_region
      %s14 = ssub.s32 128, 128
      %15 = vsyncadd [#allocation3], %s14
      %s17 = sshll.u32 [#allocation2], 4
      %s18 = int_to_ptr.vmem [resolvable:$true] %s17
      %20 = dma.hbm_to_vmem [thread:$0]  %s1, 128, %s18, [#allocation3]
    $region9: #{tpu_custom_call.1} parent=1 // pred_fallthru
      _
    // Predicated region
    $region10: #{tpu_custom_call.1} parent=1 // pred_check
      _
    $region11: #{tpu_custom_call.1} parent=1 // pred_check_branch
      %22 = sbr.rel (0) target = $region13
    $region12: #{tpu_custom_call.1} parent=1 // pred_region
      _
    $region13: #{tpu_custom_call.1} parent=1 // pred_fallthru
      _
    // Predicated region
    $region14: #{tpu_custom_call.1} parent=1 // pred_check
      _
    $region15: #{tpu_custom_call.1} parent=1 // pred_check_branch
      %24 = sbr.rel (0) target = $region17
    $region16: #{tpu_custom_call.1} parent=1 // pred_region
      %25 = dma.done [#allocation3], 128
    $region17: #{tpu_custom_call.1} parent=1 // pred_fallthru
      _
    %v26 = vld [vmem:[%s0] sm:$0xff]
    %v27 = vmul.f32 %v26, 0.25
    %v28 = vld [vmem:[#allocation2] sm:$0xff]
    %v29 = vmul.f32 %v28, 0.25
    %v30 = vld [vmem:[%s2] sm:$0xff]
    %v31 = vlaneseq
    %v32 = vand.u32 %v31, 127
    %33 = vset.pattern.permute.xlu0 0
    %34 = vperm.xlu0 %33, %v30
    %v35 = vpop.permute.xlu0 %34
    %vm36 = vcmp.eq.s32.totalorder %v32, %v35
    %37 = vmax.xlane.f32.xlu0 %v27
    %v38 = vpop.xlane.xlu0 %37
    %v39 = vsub.f32 %v27, %v38
    %40 = vmax.xlane.f32.xlu0 %v29
    %v41 = vpop.xlane.xlu0 %40
    %v42 = vsub.f32 %v29, %v41
    %v43 = vmul.f32 %v39, 1.442695
    %v44 = vpow.pop %v43
    %v45 = vmul.f32 %v42, 1.442695
    %v46 = vpow.pop %v45
    %v47 = vsel %vm36, %v44, 0.0
    %v48 = vsel %vm36, %v46, 0.0
    %49 = vadd.xlane.f32.xlu0 %v47
    %v50 = vpop.xlane.xlu0 %49
    %51 = vadd.xlane.f32.xlu0 %v48
    %v52 = vpop.xlane.xlu0 %51
    %53 = vadd.xlane.f32.xlu0 %v44
    %v54 = vpop.xlane.xlu0 %53
    %55 = vadd.xlane.f32.xlu0 %v46
    %v56 = vpop.xlane.xlu0 %55
    %v57 = vsub.f32 %v54, %v50
    %v58 = vsub.f32 %v56, %v52
    %v59 = vrcp.pop %v54
    %v60 = vmul.f32 %v50, %v59
    %v61 = vmul.f32 %v57, %v59
    %v62 = vrcp.pop %v56
    %v63 = vmul.f32 %v52, %v62
    %v64 = vmul.f32 %v58, %v62
    %vm65 = vcmp.gt.f32.partialorder %v63, 0.0
    %v66 = vlog2.pop %v63
    %v67 = vmul.f32 %v66, 0.6931472
    %v68 = vlog2.pop %v60
    %v69 = vmul.f32 %v68, 0.6931472
    %v70 = vsub.f32 %v67, %v69
    %v71 = vmul.f32 %v63, %v70
    %v72 = vsel %vm65, %v71, 0.0
    %vm73 = vcmp.gt.f32.partialorder %v64, 0.0
    %v74 = vlog2.pop %v64
    %v75 = vmul.f32 %v74, 0.6931472
    %v76 = vlog2.pop %v61
    %v77 = vmul.f32 %v76, 0.6931472
    %v78 = vsub.f32 %v75, %v77
    %v79 = vmul.f32 %v64, %v78
    %v80 = vsel %vm73, %v79, 0.0
    %v81 = vadd.f32 %v72, %v80
    %v82 = vsub.f32 %v42, %v39
    %v83 = vsub.f32 %v46, %v48
    %v84 = vmul.f32 %v83, %v82
    %85 = vadd.xlane.f32.xlu0 %v84
    %v86 = vpop.xlane.xlu0 %85
    %v87 = vrcp.pop %v58
    %v88 = vmul.f32 %v86, %v87
    %v89 = vlog2.pop %v58
    %v90 = vmul.f32 %v89, 0.6931472
    %v91 = vlog2.pop %v57
    %v92 = vmul.f32 %v91, 0.6931472
    %v93 = vsub.f32 %v90, %v92
    %v94 = vsub.f32 %v88, %v93
    %v95 = vlaneseq
    %v96 = vshrl.u32 %v95, 7
    %s97 = smul.u32 0, 8
    %v98 = vstv %s97
    %v99 = vadd.s32 %v96, %v98
    %vm100 = vcmp.lt.s32.totalorder %v99, 8
    %v101 = vsel %vm100, 1, 0
    %v102 = vcvt.s32.f32 %v101
    %v103 = vadd.f32 %v81, %v94
    %v104 = vmul.f32 %v102, %v103
    %vm105 = vcmask 7168
    %106 = vst.msk [vmem:[%s3] sm:$0xff] %vm105, %v104
    // Predicated region
    $region18: #{tpu_custom_call.1} parent=1 // pred_check
      _
    $region19: #{tpu_custom_call.1} parent=1 // pred_check_branch
      %108 = sbr.rel (0) target = $region21
    $region20: #{tpu_custom_call.1} parent=1 // pred_region
      _
    $region21: #{tpu_custom_call.1} parent=1 // pred_fallthru
      _
    // Predicated region
    $region22: #{tpu_custom_call.1} parent=1 // pred_check
      _
    $region23: #{tpu_custom_call.1} parent=1 // pred_check_branch
      %110 = sbr.rel (0) target = $region25
    $region24: #{tpu_custom_call.1} parent=1 // pred_region
      _
    $region25: #{tpu_custom_call.1} parent=1 // pred_fallthru
      _
    %111 = vsyncpa [#allocation3], 1

</llo_original>
